<compile_context>
chip_gen: v7x
topology: tpu7x:2x2x1
jax: 0.10.0
libtpu: 0.0.40
codegen_flags: <defaults>
</compile_context>

<pallas_src>
import jax
import jax.numpy as jnp
from jax.experimental import pallas as pl
from jax.experimental.pallas import tpu as pltpu


def _identity_copy_kernel(x_ref, o_ref):
    # x_ref / o_ref: (tm, L) VMEM tiles — lane-dense identity copy.
    o_ref[...] = x_ref[...]


def _vmem_limit_bytes() -> int:
    """Generation-gated scoped-VMEM limit: half of physical, capped at 64 MiB.
    -> 64 MiB on v5e/v6e (128 MiB physical), 32 MiB on v7x (64 MiB physical)."""
    cap = 128 << 20
    try:
        info = pltpu.get_tpu_info()
        cap = int(getattr(info, "vmem_capacity_bytes", cap))
    except Exception:
        pass
    return int(min(cap // 2, 64 << 20))


def _choose_lane_width(total_elems: int):
    """Largest multiple of 128 (up to 8192) that evenly divides the element
    count, so the flat copy uses full, unmasked 128-lane stores."""
    for lane in (8192, 4096, 2048, 1024, 512, 256, 128):
        if total_elems % lane == 0:
            return lane
    return None


def _choose_row_tile(rows: int, lane: int, dtype_bytes: int,
                     vmem_budget_bytes: int) -> int:
    """Largest row tile that is a multiple of 8 sublanes and fits a
    double-buffered VMEM budget (2 bufs x (in + out) = 4 x tm x lane x bytes),
    while still leaving >= 2 grid steps for v7x megacore sharding."""
    if rows < 8:
        return rows  # full-extent block: no (8,128) divisibility constraint
    by_budget = vmem_budget_bytes // (4 * lane * dtype_bytes)
    tm = min(rows, max(8, by_budget))
    tm = max(8, (tm // 8) * 8)
    if tm >= rows and rows >= 16:
        # Cap so the grid has at least 2 steps (both v7x TensorCores stream);
        # costs at most one extra ~0.35 us grid step on single-TC chips.
        half = -(-rows // 2)
        tm = min(rows, max(8, ((half + 7) // 8) * 8))
    return tm


def prepare_for_mha(x, heads: int, d_k: int):
    """Pallas equivalent of PrepareForMultiHeadAttention.forward.

    x: [..., heads * d_k]  ->  [..., heads, d_k]

    Note: the fastest version is simply
        x.reshape(*x.shape[:-1], heads, d_k)
    (zero HBM traffic).  The Pallas path below exists as the kernel exercise
    and streams the data once through VMEM at near the HBM copy roofline.
    """
    head_shape = x.shape[:-1]
    d_model = x.shape[-1]
    assert d_model == heads * d_k, "last dim must equal heads * d_k"

    total = 1
    for s in x.shape:
        total *= s

    dtype_bytes = jnp.dtype(x.dtype).itemsize
    vmem_limit = _vmem_limit_bytes()
    vmem_budget = (vmem_limit * 3) // 4  # headroom under the scoped limit

    lane = _choose_lane_width(total)
    if lane is None:
        # Fallback: element count not a multiple of 128; keep the full feature
        # dim as the (full-extent) lane axis so the block is still legal.
        lane = d_model
        rows = total // d_model
    else:
        rows = total // lane

    x2d = x.reshape(rows, lane)
    tm = _choose_row_tile(rows, lane, dtype_bytes, vmem_budget)
    grid = (pl.cdiv(rows, tm),)

    out2d = pl.pallas_call(
        _identity_copy_kernel,
        out_shape=jax.ShapeDtypeStruct((rows, lane), x.dtype),
        grid_spec=pltpu.PrefetchScalarGridSpec(
            num_scalar_prefetch=0,
            grid=grid,
            # Lane-dense 2D blocks: unmasked full-lane stores for any d_model.
            in_specs=[pl.BlockSpec((tm, lane), lambda i: (i, 0))],
            out_specs=pl.BlockSpec((tm, lane), lambda i: (i, 0)),
        ),
        compiler_params=pltpu.CompilerParams(
            dimension_semantics=("parallel",),
            vmem_limit_bytes=vmem_limit,
        ),
    )(x2d)

    # The head split itself is a free reshape in the wrapper (the kernel only
    # ever sees the lane-dense flat layout; no in-kernel relayout).
    return out2d.reshape(*head_shape, heads, d_k)


if __name__ == "__main__":
    # Small shapes consistent with the module: seq=8, batch=2, heads=4, d_k=8,
    # so d_model = heads * d_k = 32 (as forward's view requires).
    seq, batch, heads, d_k = 8, 2, 4, 8
    d_model = heads * d_k

    key = jax.random.PRNGKey(0)
    x = jax.random.normal(key, (seq, batch, d_model), dtype=jnp.float32)

    # (The module's nn.Linear parameters are intentionally not constructed /
    #  applied: the reference forward() never calls self.linear.)

    # Pure-JAX reference of the forward pass.
    ref = x.reshape(seq, batch, heads, d_k)

    out = prepare_for_mha(x, heads, d_k)
    out = jax.block_until_ready(out)

    assert out.shape == (seq, batch, heads, d_k)
    assert jnp.array_equal(out, ref)

    print("KERNEL_OK")
</pallas_src>

<mosaic_0001>
module attributes {stable_mosaic.version = 11 : i64} {
  func.func @_identity_copy_kernel(%arg0: i32, %arg1: memref<1x512xf32, #tpu.memory_space<vmem>>, %arg2: memref<1x512xf32, #tpu.memory_space<vmem>>) attributes {dimension_semantics = [#tpu.dimension_semantics<parallel>], iteration_bounds = array<i64: 1>, scalar_prefetch = 0 : i64, scratch_operands = 0 : i64, tpu.core_type = #tpu.core_type<tc>, window_params = [{transform_indices = @transform_0, window_bounds = array<i64: 1, 512>}, {transform_indices = @transform_1, window_bounds = array<i64: 1, 512>}]} {
    %c0 = arith.constant 0 : index
    %c0_0 = arith.constant 0 : index
    %0 = vector.load %arg1[%c0, %c0_0] : memref<1x512xf32, #tpu.memory_space<vmem>>, vector<1x512xf32>
    %c0_1 = arith.constant 0 : index
    %c0_2 = arith.constant 0 : index
    %1 = vector.load %arg2[%c0_1, %c0_2] : memref<1x512xf32, #tpu.memory_space<vmem>>, vector<1x512xf32>
    tpu.vector_store %arg2[%c0_1, %c0_2], %0 {strides = array<i32>} : memref<1x512xf32, #tpu.memory_space<vmem>>, vector<1x512xf32>,
    return
  }
  func.func @transform_0(%arg0: i32) -> (i32, i32) {
    %c0_i32 = arith.constant 0 : i32
    %c0_i32_0 = arith.constant 0 : i32
    return %arg0, %c0_i32 : i32, i32
  }
  func.func @transform_1(%arg0: i32) -> (i32, i32) {
    %c0_i32 = arith.constant 0 : i32
    %c0_i32_0 = arith.constant 0 : i32
    return %arg0, %c0_i32 : i32, i32
  }
}

</mosaic_0001>

<llo_original>
// kernel: tpu_custom_call.1
$region0: #{tpu_custom_call.1}
  #allocation0 [shape = 'u32[]', space=smem, size = 0x4, offset = 0x4, fixed_abs, tag = 'smem constant byte address 0x4 - core index']
  #allocation1 [shape = 'u32[144,128]{1,0:T(1,128)}', space=vmem, size = 0x12000, scoped, tag = 'internal scratch']
  %s0 = inlined_call_operand.hbm [shape: f32[1,512], index: 0, kind: input, shape index: {}]
  %s1 = inlined_call_operand.hbm [shape: f32[1,512], index: 1, kind: output, shape index: {}]
  %s2 = sld [smem:[#allocation0]]
  $region18: #{tpu_custom_call.1} parent=0
    _
  %s4 = ssub.s32 1, %s2
  %s5 = scalar_select 0, %s4, %s2
  $region1: #{tpu_custom_call.1} parent=0
    #allocation2 [shape = 'u8[2048]{0}', space=vmem, size = 0x800, scoped, tag = 'input window, operand 0, single buffered']
    #allocation3 [shape = 's32[1]{0}', space=sflag, size = 0x4, scoped, tag = 'scoped memory for tpu_custom_call.1']
    #allocation4 [shape = 's32[1]{0}', space=sflag, size = 0x4, scoped, tag = 'scoped memory for tpu_custom_call.1']
    #allocation5 [shape = 'u8[2048]{0}', space=vmem, size = 0x800, scoped, tag = 'output window, operand 0, single buffered']
    %6 = vsyncpa [#allocation3], 0
    %7 = vsyncpa [#allocation4], 0
    // Predicated region
    $region2: #{tpu_custom_call.1} parent=1 // pred_check
      _
    $region3: #{tpu_custom_call.1} parent=1 // pred_check_branch
      %9 = sbr.rel (0) target = $region5
    $region4: #{tpu_custom_call.1} parent=1 // pred_region
      %s11 = ssub.s32 64, 64
      %12 = vsyncadd [#allocation3], %s11
      %s14 = sshll.u32 [#allocation2], 4
      %s15 = int_to_ptr.vmem [resolvable:$true] %s14
      %17 = dma.hbm_to_vmem [thread:$0]  %s0, 64, %s15, [#allocation3]
    $region5: #{tpu_custom_call.1} parent=1 // pred_fallthru
      _
    // Predicated region
    $region6: #{tpu_custom_call.1} parent=1 // pred_check
      _
    $region7: #{tpu_custom_call.1} parent=1 // pred_check_branch
      %19 = sbr.rel (0) target = $region9
    $region8: #{tpu_custom_call.1} parent=1 // pred_region
      %20 = dma.done [#allocation3], 64
    $region9: #{tpu_custom_call.1} parent=1 // pred_fallthru
      _
    %v21 = vld [vmem:[#allocation2] sm:$0xf]
    %v22 = vlaneseq
    %vm23 = vcmp.ge.s32.totalorder %v22, 0
    %vm24 = vcmp.lt.s32.totalorder %v22, 512
    %vm25 = vmand %vm23, %vm24
    %26 = vst.msk [vmem:[#allocation5] sm:$0xf] %vm25, %v21
    // Predicated region
    $region10: #{tpu_custom_call.1} parent=1 // pred_check
      _
    $region11: #{tpu_custom_call.1} parent=1 // pred_check_branch
      %28 = sbr.rel (0) target = $region13
    $region12: #{tpu_custom_call.1} parent=1 // pred_region
      %s30 = ssub.s32 64, 64
      %31 = vsyncadd [#allocation4], %s30
      %s33 = sshll.u32 [#allocation5], 4
      %s34 = int_to_ptr.vmem [resolvable:$true] %s33
      %36 = dma.vmem_to_hbm [thread:$0]  %s34, 64, %s1, [#allocation4]
    $region13: #{tpu_custom_call.1} parent=1 // pred_fallthru
      _
    // Predicated region
    $region14: #{tpu_custom_call.1} parent=1 // pred_check
      _
    $region15: #{tpu_custom_call.1} parent=1 // pred_check_branch
      %38 = sbr.rel (0) target = $region17
    $region16: #{tpu_custom_call.1} parent=1 // pred_region
      %39 = dma.done [#allocation4], 64
    $region17: #{tpu_custom_call.1} parent=1 // pred_fallthru
      _
    %40 = vsyncpa [#allocation3], 1
    %41 = vsyncpa [#allocation4], 1

</llo_original>
